<compile_context>
chip_gen: v7x
topology: tpu7x:2x2x1
jax: 0.10.0
libtpu: 0.0.40
codegen_flags: <defaults>
</compile_context>

<pallas_src>
import functools

import jax
import jax.numpy as jnp
from jax.experimental import pallas as pl
from jax.experimental.pallas import tpu as pltpu


HEAD_PAD = 4   # packed head output width: [logits(2) | predictions(1) | zero pad(1)]
TB_CAP = 8192  # batch tile cap (multiple of 8); ~16 MiB double-buffered VMEM


def custom_model_kernel(x_ref,             # (TB, 10)  f32  (cast to bf16 in-kernel)
                        w1_ref, b1_ref,    # (10, 20)  bf16, (1, 20) f32
                        w2h_ref, b2h_ref,  # (20, 4)   bf16, (1, 4)  f32  (encoder2+heads fused)
                        out_ref):          # (TB, 4)   f32
    x = x_ref[...].astype(jnp.bfloat16)

    # encoder layer 1 + ReLU  (bf16 inputs, f32 accumulation, f32 elementwise)
    h = jnp.dot(x, w1_ref[...], preferred_element_type=jnp.float32) + b1_ref[...]
    h = jnp.maximum(h, 0.0).astype(jnp.bfloat16)

    # encoder layer 2 fused with both heads: one MXU push, one packed store
    out_ref[...] = (jnp.dot(h, w2h_ref[...], preferred_element_type=jnp.float32)
                    + b2h_ref[...]).astype(out_ref.dtype)


def _choose_batch_tile(B):
    TB = min(B, TB_CAP)
    if TB != B and TB % 8 != 0:        # keep second-minor dim 8-aligned for full tiles
        TB = max(8, (TB // 8) * 8)
    return TB


@functools.partial(jax.jit, static_argnames=())
def custom_model_forward(x, params):
    B = x.shape[0]
    TB = _choose_batch_tile(B)
    grid = (pl.cdiv(B, TB),)

    # Weights: bf16 for MXU / halved HBM+VMEM bytes; biases stay f32.
    w1 = params["w1"].astype(jnp.bfloat16)
    b1 = params["b1"].astype(jnp.float32)

    # Fuse classifier + regressor into one padded (10, 4) head, then pre-compose
    # it with encoder layer 2 in f32 (one fewer bf16 rounding than chaining).
    wh = jnp.concatenate([params["wc"], params["wr"]], axis=1)            # (10, 3)
    wh = jnp.pad(wh, ((0, 0), (0, HEAD_PAD - wh.shape[1])))                # (10, 4)
    bh = jnp.concatenate([params["bc"], params["br"]], axis=1)            # (1, 3)
    bh = jnp.pad(bh, ((0, 0), (0, HEAD_PAD - bh.shape[1])))                # (1, 4)

    w2h = jnp.dot(params["w2"], wh).astype(jnp.bfloat16)                   # (20, 4)
    b2h = (jnp.dot(params["b2"], wh) + bh).astype(jnp.float32)             # (1, 4)

    def resident(shape):
        # Full-array block with constant index_map -> DMA'd once, stays in VMEM.
        return pl.BlockSpec(shape, lambda i: (0, 0))

    out = pl.pallas_call(
        custom_model_kernel,
        out_shape=jax.ShapeDtypeStruct((B, HEAD_PAD), jnp.float32),
        grid=grid,
        in_specs=[
            pl.BlockSpec((TB, x.shape[1]), lambda i: (i, 0)),              # x tiles (f32)
            resident(w1.shape), resident(b1.shape),
            resident(w2h.shape), resident(b2h.shape),
        ],
        out_specs=pl.BlockSpec((TB, HEAD_PAD), lambda i: (i, 0)),
        compiler_params=pltpu.CompilerParams(
            dimension_semantics=("parallel",),       # batch loop shardable across TCs
            vmem_limit_bytes=32 * 1024 * 1024,       # safe headroom on v5e/v6e/v7x
        ),
    )(x, w1, b1, w2h, b2h)

    # NOTE: downstream consumers that can take the packed (B, 4) array directly
    # should do so; these slices are kept only to preserve the module's dict API.
    return {"logits": out[:, :2], "predictions": out[:, 2:3]}


def init_params(key):
    # Deterministic synthetic init (PyTorch-style uniform bounds per layer fan-in).
    ks = jax.random.split(key, 8)

    def linear(kw, kb, fan_in, fan_out):
        bound = 1.0 / jnp.sqrt(fan_in)
        w = jax.random.uniform(kw, (fan_in, fan_out), jnp.float32, -bound, bound)
        b = jax.random.uniform(kb, (1, fan_out), jnp.float32, -bound, bound)
        return w, b

    w1, b1 = linear(ks[0], ks[1], 10, 20)
    w2, b2 = linear(ks[2], ks[3], 20, 10)
    wc, bc = linear(ks[4], ks[5], 10, 2)
    wr, br = linear(ks[6], ks[7], 10, 1)
    return {"w1": w1, "b1": b1, "w2": w2, "b2": b2,
            "wc": wc, "bc": bc, "wr": wr, "br": br}


def reference_forward(x, params):
    # Pure-f32 reference with the original (un-fused) module semantics.
    h = jnp.maximum(jnp.dot(x, params["w1"]) + params["b1"], 0.0)
    feat = jnp.dot(h, params["w2"]) + params["b2"]
    logits = jnp.dot(feat, params["wc"]) + params["bc"]
    preds = jnp.dot(feat, params["wr"]) + params["br"]
    return logits, preds


if __name__ == "__main__":
    key = jax.random.PRNGKey(0)
    k_params, k_x = jax.random.split(key)

    params = init_params(k_params)
    x = jax.random.normal(k_x, (8, 10), dtype=jnp.float32)

    out = custom_model_forward(x, params)
    jax.block_until_ready(out)

    ref_logits, ref_preds = reference_forward(x, params)
    assert out["logits"].shape == (8, 2) and out["predictions"].shape == (8, 1)
    assert jnp.allclose(out["logits"], ref_logits, atol=3e-2), "logits mismatch"
    assert jnp.allclose(out["predictions"], ref_preds, atol=3e-2), "predictions mismatch"

    print("KERNEL_OK")
</pallas_src>

<mosaic_0001>
module attributes {stable_mosaic.version = 11 : i64} {
  func.func @custom_model_kernel(%arg0: i32, %arg1: memref<8x10xf32, #tpu.memory_space<vmem>>, %arg2: memref<10x20xbf16, #tpu.memory_space<vmem>>, %arg3: memref<1x20xf32, #tpu.memory_space<vmem>>, %arg4: memref<20x4xbf16, #tpu.memory_space<vmem>>, %arg5: memref<1x4xf32, #tpu.memory_space<vmem>>, %arg6: memref<8x4xf32, #tpu.memory_space<vmem>>) attributes {dimension_semantics = [#tpu.dimension_semantics<parallel>], iteration_bounds = array<i64: 1>, scalar_prefetch = 0 : i64, scratch_operands = 0 : i64, tpu.core_type = #tpu.core_type<tc>, window_params = [{transform_indices = @transform_0, window_bounds = array<i64: 8, 10>}, {pipeline_mode = #tpu.pipeline_mode<synchronous>, transform_indices = @transform_1, window_bounds = array<i64: 10, 20>}, {pipeline_mode = #tpu.pipeline_mode<synchronous>, transform_indices = @transform_2, window_bounds = array<i64: 1, 20>}, {pipeline_mode = #tpu.pipeline_mode<synchronous>, transform_indices = @transform_3, window_bounds = array<i64: 20, 4>}, {pipeline_mode = #tpu.pipeline_mode<synchronous>, transform_indices = @transform_4, window_bounds = array<i64: 1, 4>}, {transform_indices = @transform_5, window_bounds = array<i64: 8, 4>}]} {
    %c0 = arith.constant 0 : index
    %c0_0 = arith.constant 0 : index
    %0 = vector.load %arg1[%c0, %c0_0] : memref<8x10xf32, #tpu.memory_space<vmem>>, vector<8x10xf32>
    %1 = arith.truncf %0 : vector<8x10xf32> to vector<8x10xbf16>
    %c0_1 = arith.constant 0 : index
    %c0_2 = arith.constant 0 : index
    %2 = vector.load %arg2[%c0_1, %c0_2] : memref<10x20xbf16, #tpu.memory_space<vmem>>, vector<10x20xbf16>
    %cst = arith.constant dense<0.000000e+00> : vector<8x20xf32>
    %3 = tpu.matmul %1, %2, %cst {dimension_numbers = #tpu.dot_dimension_numbers<[1], [0], [0], [1], [0, 0, 1, 1], [], []>} : vector<8x10xbf16>, vector<10x20xbf16>, vector<8x20xf32> -> vector<8x20xf32>
    %c0_3 = arith.constant 0 : index
    %c0_4 = arith.constant 0 : index
    %4 = vector.load %arg3[%c0_3, %c0_4] : memref<1x20xf32, #tpu.memory_space<vmem>>, vector<1x20xf32>
    %5 = vector.broadcast %4 : vector<1x20xf32> to vector<8x20xf32>
    %6 = arith.addf %3, %5 : vector<8x20xf32>
    %cst_5 = arith.constant 0.000000e+00 : f32
    %7 = vector.broadcast %cst_5 : f32 to vector<8x20xf32>
    %8 = arith.maximumf %6, %7 : vector<8x20xf32>
    %9 = arith.truncf %8 : vector<8x20xf32> to vector<8x20xbf16>
    %c0_6 = arith.constant 0 : index
    %c0_7 = arith.constant 0 : index
    %10 = vector.load %arg4[%c0_6, %c0_7] : memref<20x4xbf16, #tpu.memory_space<vmem>>, vector<20x4xbf16>
    %cst_8 = arith.constant dense<0.000000e+00> : vector<8x4xf32>
    %11 = tpu.matmul %9, %10, %cst_8 {dimension_numbers = #tpu.dot_dimension_numbers<[1], [0], [0], [1], [0, 0, 1, 1], [], []>} : vector<8x20xbf16>, vector<20x4xbf16>, vector<8x4xf32> -> vector<8x4xf32>
    %c0_9 = arith.constant 0 : index
    %c0_10 = arith.constant 0 : index
    %12 = vector.load %arg5[%c0_9, %c0_10] : memref<1x4xf32, #tpu.memory_space<vmem>>, vector<1x4xf32>
    %13 = vector.broadcast %12 : vector<1x4xf32> to vector<8x4xf32>
    %14 = arith.addf %11, %13 : vector<8x4xf32>
    %c0_11 = arith.constant 0 : index
    %c0_12 = arith.constant 0 : index
    %15 = vector.load %arg6[%c0_11, %c0_12] : memref<8x4xf32, #tpu.memory_space<vmem>>, vector<8x4xf32>
    tpu.vector_store %arg6[%c0_11, %c0_12], %14 {strides = array<i32>} : memref<8x4xf32, #tpu.memory_space<vmem>>, vector<8x4xf32>,
    return
  }
  func.func @transform_0(%arg0: i32) -> (i32, i32) {
    %c0_i32 = arith.constant 0 : i32
    %c0_i32_0 = arith.constant 0 : i32
    return %arg0, %c0_i32 : i32, i32
  }
  func.func @transform_1(%arg0: i32) -> (i32, i32) {
    %c0_i32 = arith.constant 0 : i32
    %c0_i32_0 = arith.constant 0 : i32
    %c0_i32_1 = arith.constant 0 : i32
    return %c0_i32, %c0_i32_0 : i32, i32
  }
  func.func @transform_2(%arg0: i32) -> (i32, i32) {
    %c0_i32 = arith.constant 0 : i32
    %c0_i32_0 = arith.constant 0 : i32
    %c0_i32_1 = arith.constant 0 : i32
    return %c0_i32, %c0_i32_0 : i32, i32
  }
  func.func @transform_3(%arg0: i32) -> (i32, i32) {
    %c0_i32 = arith.constant 0 : i32
    %c0_i32_0 = arith.constant 0 : i32
    %c0_i32_1 = arith.constant 0 : i32
    return %c0_i32, %c0_i32_0 : i32, i32
  }
  func.func @transform_4(%arg0: i32) -> (i32, i32) {
    %c0_i32 = arith.constant 0 : i32
    %c0_i32_0 = arith.constant 0 : i32
    %c0_i32_1 = arith.constant 0 : i32
    return %c0_i32, %c0_i32_0 : i32, i32
  }
  func.func @transform_5(%arg0: i32) -> (i32, i32) {
    %c0_i32 = arith.constant 0 : i32
    %c0_i32_0 = arith.constant 0 : i32
    return %arg0, %c0_i32 : i32, i32
  }
}

</mosaic_0001>

<llo_original>
// kernel: custom_model_forward.1
$region0: #{custom_model_forward.1}
  #allocation0 [shape = 'u32[]', space=smem, size = 0x4, offset = 0x4, fixed_abs, tag = 'smem constant byte address 0x4 - core index']
  #allocation1 [shape = 'u32[144,128]{1,0:T(1,128)}', space=vmem, size = 0x12000, scoped, tag = 'internal scratch']
  %s0 = inlined_call_operand.vmem [shape: f32[8,10], index: 0, kind: input, shape index: {}]
  %s1 = inlined_call_operand.vmem [shape: bf16[10,20], index: 1, kind: input, shape index: {}]
  %s2 = inlined_call_operand.vmem [shape: f32[1,20], index: 2, kind: input, shape index: {}]
  %s3 = inlined_call_operand.vmem [shape: bf16[20,4], index: 3, kind: input, shape index: {}]
  %s4 = inlined_call_operand.vmem [shape: f32[1,4], index: 4, kind: input, shape index: {}]
  %s5 = inlined_call_operand.vmem [shape: f32[8,4], index: 5, kind: output, shape index: {}]
  %s6 = sld [smem:[#allocation0]]
  $region30: #{custom_model_forward.1} parent=0
    _
  %s8 = ssub.s32 1, %s6
  %s9 = scalar_select 0, %s8, %s6
  // Predicated region
  $region2: #{custom_model_forward.1} parent=0 // pred_check
    _
  $region3: #{custom_model_forward.1} parent=0 // pred_check_branch
    %11 = sbr.rel (0) target = $region5
  $region4: #{custom_model_forward.1} parent=0 // pred_region
    _
  $region5: #{custom_model_forward.1} parent=0 // pred_fallthru
    _
  // Predicated region
  $region6: #{custom_model_forward.1} parent=0 // pred_check
    _
  $region7: #{custom_model_forward.1} parent=0 // pred_check_branch
    %13 = sbr.rel (0) target = $region9
  $region8: #{custom_model_forward.1} parent=0 // pred_region
    _
  $region9: #{custom_model_forward.1} parent=0 // pred_fallthru
    _
  // Predicated region
  $region10: #{custom_model_forward.1} parent=0 // pred_check
    _
  $region11: #{custom_model_forward.1} parent=0 // pred_check_branch
    %15 = sbr.rel (0) target = $region13
  $region12: #{custom_model_forward.1} parent=0 // pred_region
    _
  $region13: #{custom_model_forward.1} parent=0 // pred_fallthru
    _
  // Predicated region
  $region14: #{custom_model_forward.1} parent=0 // pred_check
    _
  $region15: #{custom_model_forward.1} parent=0 // pred_check_branch
    %17 = sbr.rel (0) target = $region17
  $region16: #{custom_model_forward.1} parent=0 // pred_region
    _
  $region17: #{custom_model_forward.1} parent=0 // pred_fallthru
    _
  // Predicated region
  $region18: #{custom_model_forward.1} parent=0 // pred_check
    _
  $region19: #{custom_model_forward.1} parent=0 // pred_check_branch
    %19 = sbr.rel (0) target = $region21
  $region20: #{custom_model_forward.1} parent=0 // pred_region
    _
  $region21: #{custom_model_forward.1} parent=0 // pred_fallthru
    _
  %v21 = vld [vmem:[%s0] sm:$0xff]
  %v22 = vpack.c.bf16 %v21, %v21
  %v23 = vld [vmem:[%s1] sm:$0xf]
  %v24 = vld [vmem:[%s1 + $0x4] sm:$0x1]
  %v25 = vld [vmem:[%s2] sm:$0x1]
  %v27 = vlaneseq
  %v28 = vshrl.u32 %v27, 7
  %v29 = vsub.s32 0, %v28
  %v30 = vrot.slane %v25, %v29
  %v34 = vunpack.c.l.b16 %v23
  %v35 = vunpack.c.l.b16 %v24
  %v36 = vpack.c.b16 %v35, %v34
  %vm37 = vcmask 80896
  %v39 = vsel %vm37, %v22, 0
  %vm41 = vcmask 1044480
  %v43 = vsel %vm41, %v36, 0
  %45 = vmatprep.subr.bf16.mxu0 0
  %46 = vmatpush1.bf16.msra.mxu0 %v43
  %47 = vmatprep.subr.bf16.mxu0 0
  %48 = vmatpush1.bf16.msra.mxu0 0
  %49 = vmatprep.subr.bf16.mxu0 0
  %50 = vmatpush1.bf16.msra.mxu0 0
  %51 = vmatprep.subr.bf16.mxu0 0
  %52 = vmatpush1.bf16.msra.mxu0 0
  %53 = vmatprep.subr.bf16.mxu0 0
  %54 = vmatpush1.bf16.msra.mxu0 0
  %55 = vmatprep.subr.bf16.mxu0 0
  %56 = vmatpush1.bf16.msra.mxu0 0
  %57 = vmatprep.subr.bf16.mxu0 0
  %58 = vmatpush1.bf16.msra.mxu0 0
  %59 = vmatprep.subr.bf16.mxu0 0
  %60 = vmatpush1.bf16.msra.mxu0 0
  %61 = vmatprep.subr.bf16.mxu0 0
  %62 = vmatpush1.bf16.msra.mxu0 0
  %63 = vmatprep.subr.bf16.mxu0 0
  %64 = vmatpush1.bf16.msra.mxu0 0
  %65 = vmatprep.subr.bf16.mxu0 0
  %66 = vmatpush1.bf16.msra.mxu0 0
  %67 = vmatprep.subr.bf16.mxu0 0
  %68 = vmatpush1.bf16.msra.mxu0 0
  %69 = vmatprep.subr.bf16.mxu0 0
  %70 = vmatpush1.bf16.msra.mxu0 0
  %71 = vmatprep.subr.bf16.mxu0 0
  %72 = vmatpush1.bf16.msra.mxu0 0
  %73 = vmatprep.subr.bf16.mxu0 0
  %74 = vmatpush1.bf16.msra.mxu0 0
  %75 = vmatprep.subr.bf16.mxu0 0
  %76 = vmatpush1.bf16.msra.mxu0 0
  %77 = vmatprep.mubr.bf16.mxu0 0
  %78 = vmatmul.mubr.bf16.gmra.mrb[0].mxu0 %v39
  %v79 = vpop.f32.mrb[0].mxu0
  %v80 = vadd.f32 %v30, %v79
  %v81 = vpop.f32.mrb[0].mxu0
  %v82 = vpop.f32.mrb[0].mxu0
  %v83 = vpop.f32.mrb[0].mxu0
  %84 = vdwg.mxu0
  %v85 = vmax.f32 %v80, 0.0
  %v86 = vpack.c.bf16 %v85, %v85
  %v87 = vld [vmem:[%s3] sm:$0xf]
  %v88 = vld [vmem:[%s3 + $0x4] sm:$0xf]
  %v89 = vld [vmem:[%s3 + $0x8] sm:$0x3]
  %v90 = vld [vmem:[%s4] sm:$0x1]
  %v92 = vlaneseq
  %v93 = vshrl.u32 %v92, 7
  %v94 = vsub.s32 0, %v93
  %v95 = vrot.slane %v90, %v94
  %v100 = vunpack.c.l.b16 %v87
  %v101 = vunpack.c.l.b16 %v88
  %v102 = vunpack.c.l.b16 %v89
  %v103 = vpack.c.b16 %v101, %v100
  %v104 = vpack.c.b16 %v102, %v102
  %vm106 = vcmask 162816
  %v108 = vsel %vm106, %v86, 0
  %vm110 = vcmask 1041408
  %v112 = vsel %vm110, %v104, 0
  %114 = vmatprep.subr.bf16.mxu0 0
  %115 = vmatpush1.bf16.msra.mxu0 %v103
  %116 = vmatprep.subr.bf16.mxu0 0
  %117 = vmatpush1.bf16.msra.mxu0 %v112
  %118 = vmatprep.subr.bf16.mxu0 0
  %119 = vmatpush1.bf16.msra.mxu0 0
  %120 = vmatprep.subr.bf16.mxu0 0
  %121 = vmatpush1.bf16.msra.mxu0 0
  %122 = vmatprep.subr.bf16.mxu0 0
  %123 = vmatpush1.bf16.msra.mxu0 0
  %124 = vmatprep.subr.bf16.mxu0 0
  %125 = vmatpush1.bf16.msra.mxu0 0
  %126 = vmatprep.subr.bf16.mxu0 0
  %127 = vmatpush1.bf16.msra.mxu0 0
  %128 = vmatprep.subr.bf16.mxu0 0
  %129 = vmatpush1.bf16.msra.mxu0 0
  %130 = vmatprep.subr.bf16.mxu0 0
  %131 = vmatpush1.bf16.msra.mxu0 0
  %132 = vmatprep.subr.bf16.mxu0 0
  %133 = vmatpush1.bf16.msra.mxu0 0
  %134 = vmatprep.subr.bf16.mxu0 0
  %135 = vmatpush1.bf16.msra.mxu0 0
  %136 = vmatprep.subr.bf16.mxu0 0
  %137 = vmatpush1.bf16.msra.mxu0 0
  %138 = vmatprep.subr.bf16.mxu0 0
  %139 = vmatpush1.bf16.msra.mxu0 0
  %140 = vmatprep.subr.bf16.mxu0 0
  %141 = vmatpush1.bf16.msra.mxu0 0
  %142 = vmatprep.subr.bf16.mxu0 0
  %143 = vmatpush1.bf16.msra.mxu0 0
  %144 = vmatprep.subr.bf16.mxu0 0
  %145 = vmatpush1.bf16.msra.mxu0 0
  %146 = vmatprep.mubr.bf16.mxu0 0
  %147 = vmatmul.mubr.bf16.gmra.mrb[0].mxu0 %v108
  %v148 = vpop.f32.mrb[0].mxu0
  %v149 = vadd.f32 %v95, %v148
  %v150 = vpop.f32.mrb[0].mxu0
  %v151 = vpop.f32.mrb[0].mxu0
  %v152 = vpop.f32.mrb[0].mxu0
  %153 = vdwg.mxu0
  %vm154 = vcmask 31744
  %155 = vst.msk [vmem:[%s5] sm:$0xff] %vm154, %v149
  // Predicated region
  $region22: #{custom_model_forward.1} parent=0 // pred_check
    _
  $region23: #{custom_model_forward.1} parent=0 // pred_check_branch
    %157 = sbr.rel (0) target = $region25
  $region24: #{custom_model_forward.1} parent=0 // pred_region
    _
  $region25: #{custom_model_forward.1} parent=0 // pred_fallthru
    _
  // Predicated region
  $region26: #{custom_model_forward.1} parent=0 // pred_check
    _
  $region27: #{custom_model_forward.1} parent=0 // pred_check_branch
    %159 = sbr.rel (0) target = $region29
  $region28: #{custom_model_forward.1} parent=0 // pred_region
    _
  $region29: #{custom_model_forward.1} parent=0 // pred_fallthru
    _

</llo_original>
